<compile_context>
chip_gen: v7x
topology: tpu7x:2x2x1
jax: 0.10.0
libtpu: 0.0.40
codegen_flags: <defaults>
</compile_context>

<pallas_src>
from functools import partial

import jax
import jax.numpy as jnp
from jax.experimental import pallas as pl
from jax.experimental.pallas import tpu as pltpu


def _resblock_kernel(x_ref, w1_ref, b1_ref, w2_ref, b2_ref, o_ref,
                     buf_ref, col_ref, *, height, width, margin, res_scale):
    """One batch element per grid step.

    x_ref  : (1, C, H*W)          input tile (lane-dense, spatial flattened)
    w*_ref : (C, 9*C)             conv weights, column index = (dy*3+dx)*C + c_in
    b*_ref : (C, 1)               conv bias
    o_ref  : (1, C, H*W)          output tile
    buf_ref: (C, H*W + 2*margin)  zero-margined activation copy (VMEM scratch)
    col_ref: (9*C, H*W)           im2col matrix (VMEM scratch)
    """
    C = x_ref.shape[1]
    HW = height * width

    # Zero only the margins; the interior is fully overwritten below.
    zeros_margin = jnp.zeros((C, margin), jnp.float32)
    buf_ref[:, :margin] = zeros_margin
    buf_ref[:, margin + HW:] = zeros_margin

    x = x_ref[0].astype(jnp.float32)                       # (C, H*W)

    # Lane masks for the horizontal taps (source column outside the image).
    # Vertical out-of-range taps read the zero margins, so they need no mask.
    pos = jax.lax.broadcasted_iota(jnp.int32, (1, HW), 1)
    xpos = pos % width
    not_left = xpos >= 1              # source column x-1 is valid
    not_right = xpos <= width - 2     # source column x+1 is valid

    def conv3x3(w_ref, b_ref):
        # buf_ref interior holds the conv input; build im2col as 9 shifted
        # windows, then run a single (C, 9C) @ (9C, H*W) matmul on the MXU.
        for dy in range(3):
            for dx in range(3):
                t = dy * 3 + dx
                off = (dy - 1) * width + (dx - 1)
                win = buf_ref[:, margin + off: margin + off + HW]
                if dx == 0:
                    win = jnp.where(not_left, win, 0.0)
                elif dx == 2:
                    win = jnp.where(not_right, win, 0.0)
                col_ref[t * C:(t + 1) * C, :] = win
        acc = jnp.dot(w_ref[...].astype(jnp.float32), col_ref[...],
                      preferred_element_type=jnp.float32)  # (C, H*W) f32
        return acc + b_ref[...].astype(jnp.float32)        # bias bcast over lanes

    # conv1 -> ReLU   (bf16 activations/weights could be fed to the MXU
    # directly on v6e/v7x; this module instantiation is f32.)
    buf_ref[:, margin:margin + HW] = x
    h = jnp.maximum(conv3x3(w1_ref, b1_ref), 0.0)

    # conv2 (reuse the same padded buffer; margins are still zero)
    buf_ref[:, margin:margin + HW] = h
    y = conv3x3(w2_ref, b2_ref)

    # residual: body(x) * res_scale + x
    o_ref[0] = (y * res_scale + x).astype(o_ref.dtype)


def resblock_pallas(x_nchw, w1, b1, w2, b2, res_scale=1.0):
    """x_nchw: (N, C, H, W) like PyTorch; w*: (Cout, Cin, 3, 3); b*: (Cout,)."""
    N, C, H, W = x_nchw.shape
    HW = H * W
    # Margin must cover the largest vertical tap shift (W+1); round up to a
    # full 128-lane register so the interior store stays lane-aligned.
    margin = ((W + 1 + 127) // 128) * 128

    x2 = x_nchw.reshape(N, C, HW)                 # reshape only — no transpose
    # (Cout, Cin, 3, 3) -> (Cout, 9*Cin) with column index (dy*3+dx)*Cin + c_in
    wf1 = jnp.transpose(w1, (0, 2, 3, 1)).reshape(C, 9 * C)
    wf2 = jnp.transpose(w2, (0, 2, 3, 1)).reshape(C, 9 * C)
    b1c = b1.reshape(C, 1)
    b2c = b2.reshape(C, 1)

    itemsize = x2.dtype.itemsize
    cost = pl.CostEstimate(
        flops=2 * 2 * 9 * C * C * HW * N,          # 2 convs, MAC = 2 flops
        transcendentals=0,
        bytes_accessed=(2 * N * C * HW + 2 * 9 * C * C + 2 * C) * itemsize)

    out = pl.pallas_call(
        partial(_resblock_kernel, height=H, width=W, margin=margin,
                res_scale=float(res_scale)),
        out_shape=jax.ShapeDtypeStruct((N, C, HW), x_nchw.dtype),
        grid=(N,),
        in_specs=[
            pl.BlockSpec((1, C, HW), lambda b: (b, 0, 0)),
            pl.BlockSpec((C, 9 * C), lambda b: (0, 0)),
            pl.BlockSpec((C, 1), lambda b: (0, 0)),
            pl.BlockSpec((C, 9 * C), lambda b: (0, 0)),
            pl.BlockSpec((C, 1), lambda b: (0, 0)),
        ],
        out_specs=pl.BlockSpec((1, C, HW), lambda b: (b, 0, 0)),
        scratch_shapes=[
            pltpu.VMEM((C, HW + 2 * margin), jnp.float32),   # shared pad buffer
            pltpu.VMEM((9 * C, HW), jnp.float32),            # im2col matrix
        ],
        compiler_params=pltpu.CompilerParams(
            dimension_semantics=("parallel",)),
        cost_estimate=cost,
    )(x2, wf1, b1c, wf2, b2c)

    return out.reshape(N, C, H, W)


def resblock_reference(x, w1, b1, w2, b2, res_scale=1.0):
    """Plain-JAX reference matching the PyTorch module (NCHW)."""
    def conv(inp, w, b):
        y = jax.lax.conv_general_dilated(
            inp, w, window_strides=(1, 1), padding=((1, 1), (1, 1)),
            dimension_numbers=("NCHW", "OIHW", "NCHW"))
        return y + b[None, :, None, None]

    h = jax.nn.relu(conv(x, w1, b1))
    return conv(h, w2, b2) * res_scale + x


if __name__ == "__main__":
    # Deterministic synthetic parameters (n_feats=4, kernel_size=3, bias=True,
    # bn=False, act=ReLU, res_scale=1 — the module defaults).
    n_feats, ksize = 4, 3
    N, H, W = 2, 16, 16
    res_scale = 1.0

    key = jax.random.PRNGKey(0)
    kx, k1, k2, k3, k4 = jax.random.split(key, 5)
    x = jax.random.normal(kx, (N, n_feats, H, W), dtype=jnp.float32)
    w1 = 0.1 * jax.random.normal(k1, (n_feats, n_feats, ksize, ksize), jnp.float32)
    b1 = 0.1 * jax.random.normal(k2, (n_feats,), jnp.float32)
    w2 = 0.1 * jax.random.normal(k3, (n_feats, n_feats, ksize, ksize), jnp.float32)
    b2 = 0.1 * jax.random.normal(k4, (n_feats,), jnp.float32)

    out = jax.block_until_ready(resblock_pallas(x, w1, b1, w2, b2, res_scale))
    ref = jax.block_until_ready(resblock_reference(x, w1, b1, w2, b2, res_scale))

    assert out.shape == x.shape and out.dtype == x.dtype
    assert jnp.allclose(out, ref, atol=1e-4, rtol=1e-4), "mismatch vs reference"
    print("KERNEL_OK")
</pallas_src>

<mosaic_0001>
module attributes {stable_mosaic.version = 11 : i64} {
  func.func @_resblock_kernel(%arg0: i32, %arg1: memref<1x4x256xf32, #tpu.memory_space<vmem>>, %arg2: memref<4x36xf32, #tpu.memory_space<vmem>>, %arg3: memref<4x1xf32, #tpu.memory_space<vmem>>, %arg4: memref<4x36xf32, #tpu.memory_space<vmem>>, %arg5: memref<4x1xf32, #tpu.memory_space<vmem>>, %arg6: memref<1x4x256xf32, #tpu.memory_space<vmem>>, %arg7: memref<4x512xf32, #tpu.memory_space<vmem>>, %arg8: memref<36x256xf32, #tpu.memory_space<vmem>>) attributes {dimension_semantics = [#tpu.dimension_semantics<parallel>], iteration_bounds = array<i64: 2>, scalar_prefetch = 0 : i64, scratch_operands = 2 : i64, tpu.core_type = #tpu.core_type<tc>, window_params = [{transform_indices = @transform_0, window_bounds = array<i64: 1, 4, 256>}, {pipeline_mode = #tpu.pipeline_mode<synchronous>, transform_indices = @transform_1, window_bounds = array<i64: 4, 36>}, {pipeline_mode = #tpu.pipeline_mode<synchronous>, transform_indices = @transform_2, window_bounds = array<i64: 4, 1>}, {pipeline_mode = #tpu.pipeline_mode<synchronous>, transform_indices = @transform_3, window_bounds = array<i64: 4, 36>}, {pipeline_mode = #tpu.pipeline_mode<synchronous>, transform_indices = @transform_4, window_bounds = array<i64: 4, 1>}, {transform_indices = @transform_5, window_bounds = array<i64: 1, 4, 256>}]} {
    %cst = arith.constant 0.000000e+00 : f32
    %0 = vector.broadcast %cst : f32 to vector<4x128xf32>
    %c0 = arith.constant 0 : index
    %c0_0 = arith.constant 0 : index
    %1 = vector.load %arg7[%c0, %c0_0] : memref<4x512xf32, #tpu.memory_space<vmem>>, vector<4x128xf32>
    tpu.vector_store %arg7[%c0, %c0_0], %0 {strides = array<i32>} : memref<4x512xf32, #tpu.memory_space<vmem>>, vector<4x128xf32>,
    %c0_1 = arith.constant 0 : index
    %c384 = arith.constant 384 : index
    %2 = vector.load %arg7[%c0_1, %c384] : memref<4x512xf32, #tpu.memory_space<vmem>>, vector<4x128xf32>
    tpu.vector_store %arg7[%c0_1, %c384], %0 {strides = array<i32>} : memref<4x512xf32, #tpu.memory_space<vmem>>, vector<4x128xf32>,
    %c0_2 = arith.constant 0 : index
    %c0_3 = arith.constant 0 : index
    %c0_4 = arith.constant 0 : index
    %3 = vector.load %arg1[%c0_2, %c0_3, %c0_4] : memref<1x4x256xf32, #tpu.memory_space<vmem>>, vector<1x4x256xf32>
    %4 = vector.shape_cast %3 : vector<1x4x256xf32> to vector<4x256xf32>
    %5 = tpu.iota {dimensions = array<i32: 1>} : vector<1x256xi32>
    %c16_i32 = arith.constant 16 : i32
    %c0_i32 = arith.constant 0 : i32
    %6 = arith.cmpi eq, %c16_i32, %c0_i32 : i32
    %c1_i32 = arith.constant 1 : i32
    %7 = arith.select %6, %c1_i32, %c16_i32 : i32
    %8 = vector.broadcast %7 : i32 to vector<1x256xi32>
    %9 = arith.remsi %5, %8 : vector<1x256xi32>
    %c0_i32_5 = arith.constant 0 : i32
    %10 = vector.broadcast %c0_i32_5 : i32 to vector<1x256xi32>
    %11 = arith.cmpi ne, %9, %10 : vector<1x256xi32>
    %c0_i32_6 = arith.constant 0 : i32
    %12 = vector.broadcast %c0_i32_6 : i32 to vector<1x256xi32>
    %13 = arith.cmpi slt, %9, %12 : vector<1x256xi32>
    %c0_i32_7 = arith.constant 0 : i32
    %14 = arith.cmpi slt, %7, %c0_i32_7 : i32
    %15 = vector.broadcast %14 : i1 to vector<1x256xi1>
    %16 = vector.broadcast %15 : vector<1x256xi1> to vector<1x256xi1>
    %17 = arith.xori %13, %16 : vector<1x256xi1>
    %18 = arith.andi %17, %11 : vector<1x256xi1>
    %19 = vector.broadcast %7 : i32 to vector<1x256xi32>
    %20 = arith.addi %9, %19 : vector<1x256xi32>
    %21 = arith.select %18, %20, %9 : vector<1x256xi1>, vector<1x256xi32>
    %c1_i32_8 = arith.constant 1 : i32
    %22 = vector.broadcast %c1_i32_8 : i32 to vector<1x256xi32>
    %23 = arith.cmpi sge, %21, %22 : vector<1x256xi32>
    %c14_i32 = arith.constant 14 : i32
    %24 = vector.broadcast %c14_i32 : i32 to vector<1x256xi32>
    %25 = arith.cmpi sle, %21, %24 : vector<1x256xi32>
    %c0_9 = arith.constant 0 : index
    %c128 = arith.constant 128 : index
    %26 = vector.load %arg7[%c0_9, %c128] : memref<4x512xf32, #tpu.memory_space<vmem>>, vector<4x256xf32>
    tpu.vector_store %arg7[%c0_9, %c128], %4 {strides = array<i32>} : memref<4x512xf32, #tpu.memory_space<vmem>>, vector<4x256xf32>,
    %c0_10 = arith.constant 0 : index
    %c111 = arith.constant 111 : index
    %27 = vector.load %arg7[%c0_10, %c111] : memref<4x512xf32, #tpu.memory_space<vmem>>, vector<4x256xf32>
    %cst_11 = arith.constant 0.000000e+00 : f32
    %28 = vector.shape_cast %23 : vector<1x256xi1> to vector<1x256xi1>
    %29 = vector.broadcast %28 : vector<1x256xi1> to vector<4x256xi1>
    %30 = vector.broadcast %cst_11 : f32 to vector<4x256xf32>
    %31 = arith.select %29, %27, %30 : vector<4x256xi1>, vector<4x256xf32>
    %c0_12 = arith.constant 0 : index
    %c0_13 = arith.constant 0 : index
    %32 = vector.load %arg8[%c0_12, %c0_13] : memref<36x256xf32, #tpu.memory_space<vmem>>, vector<4x256xf32>
    tpu.vector_store %arg8[%c0_12, %c0_13], %31 {strides = array<i32>} : memref<36x256xf32, #tpu.memory_space<vmem>>, vector<4x256xf32>,
    %c0_14 = arith.constant 0 : index
    %c112 = arith.constant 112 : index
    %33 = vector.load %arg7[%c0_14, %c112] : memref<4x512xf32, #tpu.memory_space<vmem>>, vector<4x256xf32>
    %c4 = arith.constant 4 : index
    %c0_15 = arith.constant 0 : index
    %34 = vector.load %arg8[%c4, %c0_15] : memref<36x256xf32, #tpu.memory_space<vmem>>, vector<4x256xf32>
    tpu.vector_store %arg8[%c4, %c0_15], %33 {strides = array<i32>} : memref<36x256xf32, #tpu.memory_space<vmem>>, vector<4x256xf32>,
    %c0_16 = arith.constant 0 : index
    %c113 = arith.constant 113 : index
    %35 = vector.load %arg7[%c0_16, %c113] : memref<4x512xf32, #tpu.memory_space<vmem>>, vector<4x256xf32>
    %cst_17 = arith.constant 0.000000e+00 : f32
    %36 = vector.shape_cast %25 : vector<1x256xi1> to vector<1x256xi1>
    %37 = vector.broadcast %36 : vector<1x256xi1> to vector<4x256xi1>
    %38 = vector.broadcast %cst_17 : f32 to vector<4x256xf32>
    %39 = arith.select %37, %35, %38 : vector<4x256xi1>, vector<4x256xf32>
    %c8 = arith.constant 8 : index
    %c0_18 = arith.constant 0 : index
    %40 = vector.load %arg8[%c8, %c0_18] : memref<36x256xf32, #tpu.memory_space<vmem>>, vector<4x256xf32>
    tpu.vector_store %arg8[%c8, %c0_18], %39 {strides = array<i32>} : memref<36x256xf32, #tpu.memory_space<vmem>>, vector<4x256xf32>,
    %c0_19 = arith.constant 0 : index
    %c127 = arith.constant 127 : index
    %41 = vector.load %arg7[%c0_19, %c127] : memref<4x512xf32, #tpu.memory_space<vmem>>, vector<4x256xf32>
    %cst_20 = arith.constant 0.000000e+00 : f32
    %42 = vector.shape_cast %23 : vector<1x256xi1> to vector<1x256xi1>
    %43 = vector.broadcast %42 : vector<1x256xi1> to vector<4x256xi1>
    %44 = vector.broadcast %cst_20 : f32 to vector<4x256xf32>
    %45 = arith.select %43, %41, %44 : vector<4x256xi1>, vector<4x256xf32>
    %c12 = arith.constant 12 : index
    %c0_21 = arith.constant 0 : index
    %46 = vector.load %arg8[%c12, %c0_21] : memref<36x256xf32, #tpu.memory_space<vmem>>, vector<4x256xf32>
    tpu.vector_store %arg8[%c12, %c0_21], %45 {strides = array<i32>} : memref<36x256xf32, #tpu.memory_space<vmem>>, vector<4x256xf32>,
    %c0_22 = arith.constant 0 : index
    %c128_23 = arith.constant 128 : index
    %47 = vector.load %arg7[%c0_22, %c128_23] : memref<4x512xf32, #tpu.memory_space<vmem>>, vector<4x256xf32>
    %c16 = arith.constant 16 : index
    %c0_24 = arith.constant 0 : index
    %48 = vector.load %arg8[%c16, %c0_24] : memref<36x256xf32, #tpu.memory_space<vmem>>, vector<4x256xf32>
    tpu.vector_store %arg8[%c16, %c0_24], %47 {strides = array<i32>} : memref<36x256xf32, #tpu.memory_space<vmem>>, vector<4x256xf32>,
    %c0_25 = arith.constant 0 : index
    %c129 = arith.constant 129 : index
    %49 = vector.load %arg7[%c0_25, %c129] : memref<4x512xf32, #tpu.memory_space<vmem>>, vector<4x256xf32>
    %cst_26 = arith.constant 0.000000e+00 : f32
    %50 = vector.shape_cast %25 : vector<1x256xi1> to vector<1x256xi1>
    %51 = vector.broadcast %50 : vector<1x256xi1> to vector<4x256xi1>
    %52 = vector.broadcast %cst_26 : f32 to vector<4x256xf32>
    %53 = arith.select %51, %49, %52 : vector<4x256xi1>, vector<4x256xf32>
    %c20 = arith.constant 20 : index
    %c0_27 = arith.constant 0 : index
    %54 = vector.load %arg8[%c20, %c0_27] : memref<36x256xf32, #tpu.memory_space<vmem>>, vector<4x256xf32>
    tpu.vector_store %arg8[%c20, %c0_27], %53 {strides = array<i32>} : memref<36x256xf32, #tpu.memory_space<vmem>>, vector<4x256xf32>,
    %c0_28 = arith.constant 0 : index
    %c143 = arith.constant 143 : index
    %55 = vector.load %arg7[%c0_28, %c143] : memref<4x512xf32, #tpu.memory_space<vmem>>, vector<4x256xf32>
    %cst_29 = arith.constant 0.000000e+00 : f32
    %56 = vector.shape_cast %23 : vector<1x256xi1> to vector<1x256xi1>
    %57 = vector.broadcast %56 : vector<1x256xi1> to vector<4x256xi1>
    %58 = vector.broadcast %cst_29 : f32 to vector<4x256xf32>
    %59 = arith.select %57, %55, %58 : vector<4x256xi1>, vector<4x256xf32>
    %c24 = arith.constant 24 : index
    %c0_30 = arith.constant 0 : index
    %60 = vector.load %arg8[%c24, %c0_30] : memref<36x256xf32, #tpu.memory_space<vmem>>, vector<4x256xf32>
    tpu.vector_store %arg8[%c24, %c0_30], %59 {strides = array<i32>} : memref<36x256xf32, #tpu.memory_space<vmem>>, vector<4x256xf32>,
    %c0_31 = arith.constant 0 : index
    %c144 = arith.constant 144 : index
    %61 = vector.load %arg7[%c0_31, %c144] : memref<4x512xf32, #tpu.memory_space<vmem>>, vector<4x256xf32>
    %c28 = arith.constant 28 : index
    %c0_32 = arith.constant 0 : index
    %62 = vector.load %arg8[%c28, %c0_32] : memref<36x256xf32, #tpu.memory_space<vmem>>, vector<4x256xf32>
    tpu.vector_store %arg8[%c28, %c0_32], %61 {strides = array<i32>} : memref<36x256xf32, #tpu.memory_space<vmem>>, vector<4x256xf32>,
    %c0_33 = arith.constant 0 : index
    %c145 = arith.constant 145 : index
    %63 = vector.load %arg7[%c0_33, %c145] : memref<4x512xf32, #tpu.memory_space<vmem>>, vector<4x256xf32>
    %cst_34 = arith.constant 0.000000e+00 : f32
    %64 = vector.shape_cast %25 : vector<1x256xi1> to vector<1x256xi1>
    %65 = vector.broadcast %64 : vector<1x256xi1> to vector<4x256xi1>
    %66 = vector.broadcast %cst_34 : f32 to vector<4x256xf32>
    %67 = arith.select %65, %63, %66 : vector<4x256xi1>, vector<4x256xf32>
    %c32 = arith.constant 32 : index
    %c0_35 = arith.constant 0 : index
    %68 = vector.load %arg8[%c32, %c0_35] : memref<36x256xf32, #tpu.memory_space<vmem>>, vector<4x256xf32>
    tpu.vector_store %arg8[%c32, %c0_35], %67 {strides = array<i32>} : memref<36x256xf32, #tpu.memory_space<vmem>>, vector<4x256xf32>,
    %c0_36 = arith.constant 0 : index
    %c0_37 = arith.constant 0 : index
    %69 = vector.load %arg2[%c0_36, %c0_37] : memref<4x36xf32, #tpu.memory_space<vmem>>, vector<4x36xf32>
    %c0_38 = arith.constant 0 : index
    %c0_39 = arith.constant 0 : index
    %70 = vector.load %arg8[%c0_38, %c0_39] : memref<36x256xf32, #tpu.memory_space<vmem>>, vector<36x256xf32>
    %cst_40 = arith.constant dense<0.000000e+00> : vector<4x256xf32>
    %71 = tpu.matmul %69, %70, %cst_40 {dimension_numbers = #tpu.dot_dimension_numbers<[1], [0], [0], [1], [0, 0, 1, 1], [], []>} : vector<4x36xf32>, vector<36x256xf32>, vector<4x256xf32> -> vector<4x256xf32>
    %c0_41 = arith.constant 0 : index
    %c0_42 = arith.constant 0 : index
    %72 = vector.load %arg3[%c0_41, %c0_42] : memref<4x1xf32, #tpu.memory_space<vmem>>, vector<4x1xf32>
    %73 = vector.broadcast %72 : vector<4x1xf32> to vector<4x256xf32>
    %74 = arith.addf %71, %73 : vector<4x256xf32>
    %cst_43 = arith.constant 0.000000e+00 : f32
    %75 = vector.broadcast %cst_43 : f32 to vector<4x256xf32>
    %76 = arith.maximumf %74, %75 : vector<4x256xf32>
    %c0_44 = arith.constant 0 : index
    %c128_45 = arith.constant 128 : index
    %77 = vector.load %arg7[%c0_44, %c128_45] : memref<4x512xf32, #tpu.memory_space<vmem>>, vector<4x256xf32>
    tpu.vector_store %arg7[%c0_44, %c128_45], %76 {strides = array<i32>} : memref<4x512xf32, #tpu.memory_space<vmem>>, vector<4x256xf32>,
    %c0_46 = arith.constant 0 : index
    %c111_47 = arith.constant 111 : index
    %78 = vector.load %arg7[%c0_46, %c111_47] : memref<4x512xf32, #tpu.memory_space<vmem>>, vector<4x256xf32>
    %cst_48 = arith.constant 0.000000e+00 : f32
    %79 = vector.shape_cast %23 : vector<1x256xi1> to vector<1x256xi1>
    %80 = vector.broadcast %79 : vector<1x256xi1> to vector<4x256xi1>
    %81 = vector.broadcast %cst_48 : f32 to vector<4x256xf32>
    %82 = arith.select %80, %78, %81 : vector<4x256xi1>, vector<4x256xf32>
    %c0_49 = arith.constant 0 : index
    %c0_50 = arith.constant 0 : index
    %83 = vector.load %arg8[%c0_49, %c0_50] : memref<36x256xf32, #tpu.memory_space<vmem>>, vector<4x256xf32>
    tpu.vector_store %arg8[%c0_49, %c0_50], %82 {strides = array<i32>} : memref<36x256xf32, #tpu.memory_space<vmem>>, vector<4x256xf32>,
    %c0_51 = arith.constant 0 : index
    %c112_52 = arith.constant 112 : index
    %84 = vector.load %arg7[%c0_51, %c112_52] : memref<4x512xf32, #tpu.memory_space<vmem>>, vector<4x256xf32>
    %c4_53 = arith.constant 4 : index
    %c0_54 = arith.constant 0 : index
    %85 = vector.load %arg8[%c4_53, %c0_54] : memref<36x256xf32, #tpu.memory_space<vmem>>, vector<4x256xf32>
    tpu.vector_store %arg8[%c4_53, %c0_54], %84 {strides = array<i32>} : memref<36x256xf32, #tpu.memory_space<vmem>>, vector<4x256xf32>,
    %c0_55 = arith.constant 0 : index
    %c113_56 = arith.constant 113 : index
    %86 = vector.load %arg7[%c0_55, %c113_56] : memref<4x512xf32, #tpu.memory_space<vmem>>, vector<4x256xf32>
    %cst_57 = arith.constant 0.000000e+00 : f32
    %87 = vector.shape_cast %25 : vector<1x256xi1> to vector<1x256xi1>
    %88 = vector.broadcast %87 : vector<1x256xi1> to vector<4x256xi1>
    %89 = vector.broadcast %cst_57 : f32 to vector<4x256xf32>
    %90 = arith.select %88, %86, %89 : vector<4x256xi1>, vector<4x256xf32>
    %c8_58 = arith.constant 8 : index
    %c0_59 = arith.constant 0 : index
    %91 = vector.load %arg8[%c8_58, %c0_59] : memref<36x256xf32, #tpu.memory_space<vmem>>, vector<4x256xf32>
    tpu.vector_store %arg8[%c8_58, %c0_59], %90 {strides = array<i32>} : memref<36x256xf32, #tpu.memory_space<vmem>>, vector<4x256xf32>,
    %c0_60 = arith.constant 0 : index
    %c127_61 = arith.constant 127 : index
    %92 = vector.load %arg7[%c0_60, %c127_61] : memref<4x512xf32, #tpu.memory_space<vmem>>, vector<4x256xf32>
    %cst_62 = arith.constant 0.000000e+00 : f32
    %93 = vector.shape_cast %23 : vector<1x256xi1> to vector<1x256xi1>
    %94 = vector.broadcast %93 : vector<1x256xi1> to vector<4x256xi1>
    %95 = vector.broadcast %cst_62 : f32 to vector<4x256xf32>
    %96 = arith.select %94, %92, %95 : vector<4x256xi1>, vector<4x256xf32>
    %c12_63 = arith.constant 12 : index
    %c0_64 = arith.constant 0 : index
    %97 = vector.load %arg8[%c12_63, %c0_64] : memref<36x256xf32, #tpu.memory_space<vmem>>, vector<4x256xf32>
    tpu.vector_store %arg8[%c12_63, %c0_64], %96 {strides = array<i32>} : memref<36x256xf32, #tpu.memory_space<vmem>>, vector<4x256xf32>,
    %c0_65 = arith.constant 0 : index
    %c128_66 = arith.constant 128 : index
    %98 = vector.load %arg7[%c0_65, %c128_66] : memref<4x512xf32, #tpu.memory_space<vmem>>, vector<4x256xf32>
    %c16_67 = arith.constant 16 : index
    %c0_68 = arith.constant 0 : index
    %99 = vector.load %arg8[%c16_67, %c0_68] : memref<36x256xf32, #tpu.memory_space<vmem>>, vector<4x256xf32>
    tpu.vector_store %arg8[%c16_67, %c0_68], %98 {strides = array<i32>} : memref<36x256xf32, #tpu.memory_space<vmem>>, vector<4x256xf32>,
    %c0_69 = arith.constant 0 : index
    %c129_70 = arith.constant 129 : index
    %100 = vector.load %arg7[%c0_69, %c129_70] : memref<4x512xf32, #tpu.memory_space<vmem>>, vector<4x256xf32>
    %cst_71 = arith.constant 0.000000e+00 : f32
    %101 = vector.shape_cast %25 : vector<1x256xi1> to vector<1x256xi1>
    %102 = vector.broadcast %101 : vector<1x256xi1> to vector<4x256xi1>
    %103 = vector.broadcast %cst_71 : f32 to vector<4x256xf32>
    %104 = arith.select %102, %100, %103 : vector<4x256xi1>, vector<4x256xf32>
    %c20_72 = arith.constant 20 : index
    %c0_73 = arith.constant 0 : index
    %105 = vector.load %arg8[%c20_72, %c0_73] : memref<36x256xf32, #tpu.memory_space<vmem>>, vector<4x256xf32>
    tpu.vector_store %arg8[%c20_72, %c0_73], %104 {strides = array<i32>} : memref<36x256xf32, #tpu.memory_space<vmem>>, vector<4x256xf32>,
    %c0_74 = arith.constant 0 : index
    %c143_75 = arith.constant 143 : index
    %106 = vector.load %arg7[%c0_74, %c143_75] : memref<4x512xf32, #tpu.memory_space<vmem>>, vector<4x256xf32>
    %cst_76 = arith.constant 0.000000e+00 : f32
    %107 = vector.shape_cast %23 : vector<1x256xi1> to vector<1x256xi1>
    %108 = vector.broadcast %107 : vector<1x256xi1> to vector<4x256xi1>
    %109 = vector.broadcast %cst_76 : f32 to vector<4x256xf32>
    %110 = arith.select %108, %106, %109 : vector<4x256xi1>, vector<4x256xf32>
    %c24_77 = arith.constant 24 : index
    %c0_78 = arith.constant 0 : index
    %111 = vector.load %arg8[%c24_77, %c0_78] : memref<36x256xf32, #tpu.memory_space<vmem>>, vector<4x256xf32>
    tpu.vector_store %arg8[%c24_77, %c0_78], %110 {strides = array<i32>} : memref<36x256xf32, #tpu.memory_space<vmem>>, vector<4x256xf32>,
    %c0_79 = arith.constant 0 : index
    %c144_80 = arith.constant 144 : index
    %112 = vector.load %arg7[%c0_79, %c144_80] : memref<4x512xf32, #tpu.memory_space<vmem>>, vector<4x256xf32>
    %c28_81 = arith.constant 28 : index
    %c0_82 = arith.constant 0 : index
    %113 = vector.load %arg8[%c28_81, %c0_82] : memref<36x256xf32, #tpu.memory_space<vmem>>, vector<4x256xf32>
    tpu.vector_store %arg8[%c28_81, %c0_82], %112 {strides = array<i32>} : memref<36x256xf32, #tpu.memory_space<vmem>>, vector<4x256xf32>,
    %c0_83 = arith.constant 0 : index
    %c145_84 = arith.constant 145 : index
    %114 = vector.load %arg7[%c0_83, %c145_84] : memref<4x512xf32, #tpu.memory_space<vmem>>, vector<4x256xf32>
    %cst_85 = arith.constant 0.000000e+00 : f32
    %115 = vector.shape_cast %25 : vector<1x256xi1> to vector<1x256xi1>
    %116 = vector.broadcast %115 : vector<1x256xi1> to vector<4x256xi1>
    %117 = vector.broadcast %cst_85 : f32 to vector<4x256xf32>
    %118 = arith.select %116, %114, %117 : vector<4x256xi1>, vector<4x256xf32>
    %c32_86 = arith.constant 32 : index
    %c0_87 = arith.constant 0 : index
    %119 = vector.load %arg8[%c32_86, %c0_87] : memref<36x256xf32, #tpu.memory_space<vmem>>, vector<4x256xf32>
    tpu.vector_store %arg8[%c32_86, %c0_87], %118 {strides = array<i32>} : memref<36x256xf32, #tpu.memory_space<vmem>>, vector<4x256xf32>,
    %c0_88 = arith.constant 0 : index
    %c0_89 = arith.constant 0 : index
    %120 = vector.load %arg4[%c0_88, %c0_89] : memref<4x36xf32, #tpu.memory_space<vmem>>, vector<4x36xf32>
    %c0_90 = arith.constant 0 : index
    %c0_91 = arith.constant 0 : index
    %121 = vector.load %arg8[%c0_90, %c0_91] : memref<36x256xf32, #tpu.memory_space<vmem>>, vector<36x256xf32>
    %cst_92 = arith.constant dense<0.000000e+00> : vector<4x256xf32>
    %122 = tpu.matmul %120, %121, %cst_92 {dimension_numbers = #tpu.dot_dimension_numbers<[1], [0], [0], [1], [0, 0, 1, 1], [], []>} : vector<4x36xf32>, vector<36x256xf32>, vector<4x256xf32> -> vector<4x256xf32>
    %c0_93 = arith.constant 0 : index
    %c0_94 = arith.constant 0 : index
    %123 = vector.load %arg5[%c0_93, %c0_94] : memref<4x1xf32, #tpu.memory_space<vmem>>, vector<4x1xf32>
    %124 = vector.broadcast %123 : vector<4x1xf32> to vector<4x256xf32>
    %125 = arith.addf %122, %124 : vector<4x256xf32>
    %cst_95 = arith.constant 1.000000e+00 : f32
    %126 = vector.broadcast %cst_95 : f32 to vector<4x256xf32>
    %127 = arith.mulf %125, %126 : vector<4x256xf32>
    %128 = arith.addf %127, %4 : vector<4x256xf32>
    %c0_96 = arith.constant 0 : index
    %c0_97 = arith.constant 0 : index
    %c0_98 = arith.constant 0 : index
    %129 = vector.load %arg6[%c0_96, %c0_97, %c0_98] : memref<1x4x256xf32, #tpu.memory_space<vmem>>, vector<1x4x256xf32>
    %130 = vector.shape_cast %129 : vector<1x4x256xf32> to vector<4x256xf32>
    %131 = vector.shape_cast %128 : vector<4x256xf32> to vector<1x4x256xf32>
    tpu.vector_store %arg6[%c0_96, %c0_97, %c0_98], %131 {strides = array<i32>} : memref<1x4x256xf32, #tpu.memory_space<vmem>>, vector<1x4x256xf32>,
    return
  }
  func.func @transform_0(%arg0: i32) -> (i32, i32, i32) {
    %c0_i32 = arith.constant 0 : i32
    %c0_i32_0 = arith.constant 0 : i32
    %c0_i32_1 = arith.constant 0 : i32
    return %arg0, %c0_i32, %c0_i32_0 : i32, i32, i32
  }
  func.func @transform_1(%arg0: i32) -> (i32, i32) {
    %c0_i32 = arith.constant 0 : i32
    %c0_i32_0 = arith.constant 0 : i32
    %c0_i32_1 = arith.constant 0 : i32
    return %c0_i32, %c0_i32_0 : i32, i32
  }
  func.func @transform_2(%arg0: i32) -> (i32, i32) {
    %c0_i32 = arith.constant 0 : i32
    %c0_i32_0 = arith.constant 0 : i32
    %c0_i32_1 = arith.constant 0 : i32
    return %c0_i32, %c0_i32_0 : i32, i32
  }
  func.func @transform_3(%arg0: i32) -> (i32, i32) {
    %c0_i32 = arith.constant 0 : i32
    %c0_i32_0 = arith.constant 0 : i32
    %c0_i32_1 = arith.constant 0 : i32
    return %c0_i32, %c0_i32_0 : i32, i32
  }
  func.func @transform_4(%arg0: i32) -> (i32, i32) {
    %c0_i32 = arith.constant 0 : i32
    %c0_i32_0 = arith.constant 0 : i32
    %c0_i32_1 = arith.constant 0 : i32
    return %c0_i32, %c0_i32_0 : i32, i32
  }
  func.func @transform_5(%arg0: i32) -> (i32, i32, i32) {
    %c0_i32 = arith.constant 0 : i32
    %c0_i32_0 = arith.constant 0 : i32
    %c0_i32_1 = arith.constant 0 : i32
    return %arg0, %c0_i32, %c0_i32_0 : i32, i32, i32
  }
}

</mosaic_0001>

<llo_original>
// kernel: tpu_custom_call.1
$region0: #{tpu_custom_call.1}
  #allocation0 [shape = 'u32[]', space=smem, size = 0x4, offset = 0x4, fixed_abs, tag = 'smem constant byte address 0x4 - core index']
  #allocation1 [shape = 'u32[144,128]{1,0:T(1,128)}', space=vmem, size = 0x12000, scoped, tag = 'internal scratch']
  #allocation2 [shape = 'f32[4,512]{1,0:T(4,128)}', space=vmem, size = 0x2000, scoped, tag = 'scratch operand']
  #allocation3 [shape = 'f32[36,256]{1,0:T(8,128)}', space=vmem, size = 0xa000, scoped, tag = 'scratch operand']
  %s0 = inlined_call_operand.hbm [shape: f32[2,4,256], index: 0, kind: input, shape index: {}]
  %s1 = inlined_call_operand.vmem [shape: f32[4,36], index: 1, kind: input, shape index: {}]
  %s2 = inlined_call_operand.vmem [shape: f32[4,1], index: 2, kind: input, shape index: {}]
  %s3 = inlined_call_operand.vmem [shape: f32[4,36], index: 3, kind: input, shape index: {}]
  %s4 = inlined_call_operand.vmem [shape: f32[4,1], index: 4, kind: input, shape index: {}]
  %s5 = inlined_call_operand.hbm [shape: f32[2,4,256], index: 5, kind: output, shape index: {}]
  %s6 = sld [smem:[#allocation0]]
  $region57: #{tpu_custom_call.1} parent=0
    _
  %s8 = ssub.s32 1, %s6
  %s9 = scalar_select 0, %s8, %s6
  $region1: #{tpu_custom_call.1} parent=0
    #allocation4 [shape = 'u8[8192]{0}', space=vmem, size = 0x2000, scoped, tag = 'input window, operand 0']
    #allocation5 [shape = 's32[2]{0}', space=sflag, size = 0x8, scoped, tag = 'scoped memory for tpu_custom_call.1']
    #allocation6 [shape = 's32[2]{0}', space=sflag, size = 0x8, scoped, tag = 'scoped memory for tpu_custom_call.1']
    #allocation7 [shape = 'u8[8192]{0}', space=vmem, size = 0x2000, scoped, tag = 'output window, operand 0']
    %10 = vsyncpa [#allocation5], 0
    %s11 = scalar_lea.sflag [#allocation5], 1
    %12 = vsyncpa %s11, 0
    %13 = vsyncpa [#allocation6], 0
    %s14 = scalar_lea.sflag [#allocation6], 1
    %15 = vsyncpa %s14, 0
    loop: start=0, step=1, limit=4
    $region2: #{tpu_custom_call.1} parent=1 // loop_pre_header
      _
    $region3: #{tpu_custom_call.1} parent=1 // loop_header
      %s17 = sphi 0, %s21
      %p18 = scmp.ge.s32.totalorder %s17, 4
      %s27 = sphi 0, %s29
      %s30 = sphi 0, %s27
      %s31 = sphi 0, %s30
      %s47 = sphi 0, %s31
      %s51 = sphi 0, %s51
      %s53 = sphi 0, %s51
      %s54 = sphi 0, %s53
      %s68 = sphi 0, %s54
      %s72 = sphi 0, %s72
      %s74 = sphi 0, %s72
      %s75 = sphi 0, %s74
      %s89 = sphi 0, %s75
      %s93 = sphi 0, %s93
      %s95 = sphi 0, %s93
      %s96 = sphi 0, %s95
      %s110 = sphi 0, %s96
      %s114 = sphi 0, %s114
      %s116 = sphi 0, %s114
      %s117 = sphi 0, %s116
      %s131 = sphi 0, %s117
      %s137 = sphi 0, %s139
      %s140 = sphi 0, %s137
      %s141 = sphi 0, %s140
      %s157 = sphi 0, %s141
    $region4: #{tpu_custom_call.1} parent=1 // loop_header_branch
      %20 = sbr.rel (%p18) target = $region8
    $region5: #{tpu_custom_call.1} parent=1 // loop_body
      %s22 = ssub.s32 %s17, 1
      %s23 = ssub.s32 %s17, 2
      %s24 = sadd.s32 %s17, 1
      %s25 = ssub.s32 %s17, %s24
      %p26 = scmp.eq.s32.totalorder %s25, 0
      %s28 = sadd.s32 %s27, 1
      %s29 = scalar_select %p26, %s27, %s28
      %p32 = pneg %p26
      %p33 = scmp.eq.s32.totalorder %s17, 1
      %p34 = por %p32, %p33
      %p35 = scmp.ne.s32.totalorder %s27, %s30
      %p36 = scmp.eq.s32.totalorder %s17, 0
      %p37 = por %p35, %p36
      %p38 = scmp.ne.s32.totalorder %s27, %s30
      %p39 = scmp.eq.s32.totalorder %s22, 1
      %p40 = por %p38, %p39
      %p41 = scmp.ne.s32.totalorder %s30, %s31
      %p42 = scmp.eq.s32.totalorder %s22, 0
      %p43 = por %p41, %p42
      %p44 = scmp.ne.s32.totalorder %s30, %s31
      %p45 = scmp.eq.s32.totalorder %s23, 1
      %p46 = por %p44, %p45
      %p48 = scmp.ne.s32.totalorder %s31, %s47
      %p49 = scmp.eq.s32.totalorder %s23, 0
      %p50 = por %p48, %p49
      %s52 = sadd.s32 %s51, 1
      %p55 = scmp.eq.s32.totalorder %s17, 1
      %p56 = scmp.ne.s32.totalorder %s51, %s53
      %p57 = scmp.eq.s32.totalorder %s17, 0
      %p58 = por %p56, %p57
      %p59 = scmp.ne.s32.totalorder %s51, %s53
      %p60 = scmp.eq.s32.totalorder %s22, 1
      %p61 = por %p59, %p60
      %p62 = scmp.ne.s32.totalorder %s53, %s54
      %p63 = scmp.eq.s32.totalorder %s22, 0
      %p64 = por %p62, %p63
      %p65 = scmp.ne.s32.totalorder %s53, %s54
      %p66 = scmp.eq.s32.totalorder %s23, 1
      %p67 = por %p65, %p66
      %p69 = scmp.ne.s32.totalorder %s54, %s68
      %p70 = scmp.eq.s32.totalorder %s23, 0
      %p71 = por %p69, %p70
      %s73 = sadd.s32 %s72, 1
      %p76 = scmp.eq.s32.totalorder %s17, 1
      %p77 = scmp.ne.s32.totalorder %s72, %s74
      %p78 = scmp.eq.s32.totalorder %s17, 0
      %p79 = por %p77, %p78
      %p80 = scmp.ne.s32.totalorder %s72, %s74
      %p81 = scmp.eq.s32.totalorder %s22, 1
      %p82 = por %p80, %p81
      %p83 = scmp.ne.s32.totalorder %s74, %s75
      %p84 = scmp.eq.s32.totalorder %s22, 0
      %p85 = por %p83, %p84
      %p86 = scmp.ne.s32.totalorder %s74, %s75
      %p87 = scmp.eq.s32.totalorder %s23, 1
      %p88 = por %p86, %p87
      %p90 = scmp.ne.s32.totalorder %s75, %s89
      %p91 = scmp.eq.s32.totalorder %s23, 0
      %p92 = por %p90, %p91
      %s94 = sadd.s32 %s93, 1
      %p97 = scmp.eq.s32.totalorder %s17, 1
      %p98 = scmp.ne.s32.totalorder %s93, %s95
      %p99 = scmp.eq.s32.totalorder %s17, 0
      %p100 = por %p98, %p99
      %p101 = scmp.ne.s32.totalorder %s93, %s95
      %p102 = scmp.eq.s32.totalorder %s22, 1
      %p103 = por %p101, %p102
      %p104 = scmp.ne.s32.totalorder %s95, %s96
      %p105 = scmp.eq.s32.totalorder %s22, 0
      %p106 = por %p104, %p105
      %p107 = scmp.ne.s32.totalorder %s95, %s96
      %p108 = scmp.eq.s32.totalorder %s23, 1
      %p109 = por %p107, %p108
      %p111 = scmp.ne.s32.totalorder %s96, %s110
      %p112 = scmp.eq.s32.totalorder %s23, 0
      %p113 = por %p111, %p112
      %s115 = sadd.s32 %s114, 1
      %p118 = scmp.eq.s32.totalorder %s17, 1
      %p119 = scmp.ne.s32.totalorder %s114, %s116
      %p120 = scmp.eq.s32.totalorder %s17, 0
      %p121 = por %p119, %p120
      %p122 = scmp.ne.s32.totalorder %s114, %s116
      %p123 = scmp.eq.s32.totalorder %s22, 1
      %p124 = por %p122, %p123
      %p125 = scmp.ne.s32.totalorder %s116, %s117
      %p126 = scmp.eq.s32.totalorder %s22, 0
      %p127 = por %p125, %p126
      %p128 = scmp.ne.s32.totalorder %s116, %s117
      %p129 = scmp.eq.s32.totalorder %s23, 1
      %p130 = por %p128, %p129
      %p132 = scmp.ne.s32.totalorder %s117, %s131
      %p133 = scmp.eq.s32.totalorder %s23, 0
      %p134 = por %p132, %p133
      %s135 = ssub.s32 %s17, %s24
      %p136 = scmp.eq.s32.totalorder %s135, 0
      %s138 = sadd.s32 %s137, 1
      %s139 = scalar_select %p136, %s137, %s138
      %p142 = pneg %p136
      %p143 = scmp.eq.s32.totalorder %s17, 1
      %p144 = por %p142, %p143
      %p145 = scmp.ne.s32.totalorder %s137, %s140
      %p146 = scmp.eq.s32.totalorder %s17, 0
      %p147 = por %p145, %p146
      %p148 = scmp.ne.s32.totalorder %s137, %s140
      %p149 = scmp.eq.s32.totalorder %s22, 1
      %p150 = por %p148, %p149
      %p151 = scmp.ne.s32.totalorder %s140, %s141
      %p152 = scmp.eq.s32.totalorder %s22, 0
      %p153 = por %p151, %p152
      %p154 = scmp.ne.s32.totalorder %s140, %s141
      %p155 = scmp.eq.s32.totalorder %s23, 1
      %p156 = por %p154, %p155
      %p158 = scmp.ne.s32.totalorder %s141, %s157
      %p159 = scmp.eq.s32.totalorder %s23, 0
      %p160 = por %p158, %p159
      %p161 = scmp.le.s32.totalorder 1, %s17
      %p162 = scmp.lt.s32.totalorder %s17, 3
      %p163 = pnand %p161, %p162
      %p164 = pneg %p163
      // Predicated region
      $region9: #{tpu_custom_call.1} parent=5 // pred_check
        _
      $region10: #{tpu_custom_call.1} parent=5 // pred_check_branch
        %166 = sbr.rel (%p163) target = $region12
      $region11: #{tpu_custom_call.1} parent=5 // pred_region
        %s167 = ssub.s32 %s17, 1
        // Predicated region
        $region13: #{tpu_custom_call.1} parent=11 // pred_check
          %p168 = pneg %p64
        $region14: #{tpu_custom_call.1} parent=11 // pred_check_branch
          %170 = sbr.rel (%p168) target = $region16
        $region15: #{tpu_custom_call.1} parent=11 // pred_region
          _
        $region16: #{tpu_custom_call.1} parent=11 // pred_fallthru
          _
        // Predicated region
        $region17: #{tpu_custom_call.1} parent=11 // pred_check
          %p171 = pneg %p85
        $region18: #{tpu_custom_call.1} parent=11 // pred_check_branch
          %173 = sbr.rel (%p171) target = $region20
        $region19: #{tpu_custom_call.1} parent=11 // pred_region
          _
        $region20: #{tpu_custom_call.1} parent=11 // pred_fallthru
          _
        // Predicated region
        $region21: #{tpu_custom_call.1} parent=11 // pred_check
          %p174 = pneg %p106
        $region22: #{tpu_custom_call.1} parent=11 // pred_check_branch
          %176 = sbr.rel (%p174) target = $region24
        $region23: #{tpu_custom_call.1} parent=11 // pred_region
          _
        $region24: #{tpu_custom_call.1} parent=11 // pred_fallthru
          _
        // Predicated region
        $region25: #{tpu_custom_call.1} parent=11 // pred_check
          %p177 = pneg %p127
        $region26: #{tpu_custom_call.1} parent=11 // pred_check_branch
          %179 = sbr.rel (%p177) target = $region28
        $region27: #{tpu_custom_call.1} parent=11 // pred_region
          _
        $region28: #{tpu_custom_call.1} parent=11 // pred_fallthru
          _
      $region12: #{tpu_custom_call.1} parent=5 // pred_fallthru
        _
      %p180 = scmp.lt.s32.totalorder %s17, 2
      // Predicated region
      $region29: #{tpu_custom_call.1} parent=5 // pred_check
        %p181 = pneg %p180
      $region30: #{tpu_custom_call.1} parent=5 // pred_check_branch
        %183 = sbr.rel (%p181) target = $region32
      $region31: #{tpu_custom_call.1} parent=5 // pred_region
        // Predicated region
        $region33: #{tpu_custom_call.1} parent=31 // pred_check
          %p184 = pneg %p37
        $region34: #{tpu_custom_call.1} parent=31 // pred_check_branch
          %186 = sbr.rel (%p184) target = $region36
        $region35: #{tpu_custom_call.1} parent=31 // pred_region
          %s187 = sand.u32 %s27, 1
          %s188 = scalar_lea.sflag [#allocation5], %s187
          %s189 = sand.u32 %s27, 1
          %s190 = smul.addr %s189, 8
          %s191 = scalar_lea.vmem [#allocation4], %s190
          %s193 = ssub.s32 128, 128
          %194 = vsyncadd %s188, %s193
          %s195 = smul.addr %s17, 2
          %s196 = smul.addr %s195, 64
          %s197 = scalar_lea.hbm %s0, %s196
          %s199 = sshll.u32 %s191, 4
          %s200 = int_to_ptr.vmem [resolvable:$true] %s199
          %202 = dma.hbm_to_vmem [thread:$0]  %s197, 128, %s200, %s188
        $region36: #{tpu_custom_call.1} parent=31 // pred_fallthru
          _
      $region32: #{tpu_custom_call.1} parent=5 // pred_fallthru
        _
      %p203 = scmp.le.s32.totalorder 1, %s17
      %p204 = scmp.lt.s32.totalorder %s17, 3
      %p205 = pnand %p203, %p204
      %p206 = pneg %p205
      // Predicated region
      $region37: #{tpu_custom_call.1} parent=5 // pred_check
        _
      $region38: #{tpu_custom_call.1} parent=5 // pred_check_branch
        %208 = sbr.rel (%p205) target = $region40
      $region39: #{tpu_custom_call.1} parent=5 // pred_region
        %s209 = ssub.s32 %s17, 1
        %s210 = sand.u32 %s30, 1
        %s211 = scalar_lea.sflag [#allocation5], %s210
        %s212 = sand.u32 %s30, 1
        %s213 = smul.addr %s212, 8
        %s214 = scalar_lea.vmem [#allocation4], %s213
        // Predicated region
        $region41: #{tpu_custom_call.1} parent=39 // pred_check
          %p215 = pneg %p43
        $region42: #{tpu_custom_call.1} parent=39 // pred_check_branch
          %217 = sbr.rel (%p215) target = $region44
        $region43: #{tpu_custom_call.1} parent=39 // pred_region
          %218 = dma.done %s211, 128
        $region44: #{tpu_custom_call.1} parent=39 // pred_fallthru
          _
        %s219 = sand.u32 %s30, 1
        %s220 = scalar_lea.sflag [#allocation5], %s219
        %s221 = sand.u32 %s30, 1
        %s222 = smul.addr %s221, 8
        %s223 = scalar_lea.vmem [#allocation4], %s222
        %p224 = pneg %p43
        %p225 = pneg %p40
        %p226 = pneg %p64
        %p227 = pneg %p61
        %p228 = pneg %p85
        %p229 = pneg %p82
        %p230 = pneg %p106
        %p231 = pneg %p103
        %p232 = pneg %p127
        %p233 = pneg %p124
        %p234 = pneg %p153
        %p235 = pneg %p150
        %s236 = sand.u32 %s140, 1
        %s237 = scalar_lea.sflag [#allocation6], %s236
        %s238 = sand.u32 %s140, 1
        %s239 = smul.addr %s238, 8
        %s240 = scalar_lea.vmem [#allocation7], %s239
        %241 = vst [vmem:[#allocation2] sm:$0xf] 0.0
        %242 = vst [vmem:[#allocation2 + $0xc] sm:$0xf] 0.0
        %v243 = vld [vmem:[%s214] sm:$0xff]
        %v244 = vlaneseq
        %v245 = vand.u32 %v244, 127
        %v246 = vadd.s32 %v245, 128
        %vm247 = vcmp.lt.s32.totalorder %v245, 0
        %v248 = vsub.s32 0, %v245
        %v249 = vsel %vm247, %v248, %v245
        %v250 = vshrl.u32 %v249, 4
        %v251 = vand.u32 %v249, 15
        %v252 = vsub.s32 0, %v251
        %v253 = vsel %vm247, %v252, %v251
        %vm254 = vcmp.lt.s32.totalorder %v246, 0
        %v255 = vsub.s32 0, %v246
        %v256 = vsel %vm254, %v255, %v246
        %v257 = vshrl.u32 %v256, 4
        %v258 = vand.u32 %v256, 15
        %v259 = vsub.s32 0, %v258
        %v260 = vsel %vm254, %v259, %v258
        %vm261 = vcmp.ne.s32.totalorder %v253, 0
        %vm262 = vcmp.ne.s32.totalorder %v260, 0
        %vm263 = vcmp.lt.s32.totalorder %v253, 0
        %vm264 = vcmp.lt.s32.totalorder %v260, 0
        %vm265 = vmand %vm263, %vm261
        %vm266 = vmand %vm264, %vm262
        %v267 = vadd.s32 %v253, 16
        %v268 = vadd.s32 %v260, 16
        %v269 = vsel %vm265, %v267, %v253
        %v270 = vsel %vm266, %v268, %v260
        %vm271 = vcmp.ge.s32.totalorder %v269, 1
        %vm272 = vcmp.ge.s32.totalorder %v270, 1
        %vm273 = vcmp.le.s32.totalorder %v269, 14
        %vm274 = vcmp.le.s32.totalorder %v270, 14
        %275 = vst [vmem:[#allocation2 + $0x4] sm:$0xff] %v243
        %v276 = vld [vmem:[#allocation2] sm:$0xff]
        %v277 = vld [vmem:[#allocation2 + $0x8] sm:$0xf]
        %v278 = vsel %vm271, 1, 0
        %v279 = vsel %vm272, 1, 0
        %vm280 = vcmp.eq.s32.totalorder %v278, 1
        %vm281 = vcmp.eq.s32.totalorder %v279, 1
        %v284 = vcombine.high %v276, %v276
        %285 = vrot.lane.b32.xlu0 %v276, 17
        %v286 = vpop.permute.xlu0 %285
        %287 = vrot.lane.b32.xlu0 %v284, 17
        %v288 = vpop.permute.xlu0 %287
        %289 = vrot.lane.b32.xlu0 %v277, 17
        %v290 = vpop.permute.xlu0 %289
        %vm291 = vcmask 138240
        %v292 = vsel %vm291, %v286, %v288
        %v293 = vsel %vm291, %v288, %v290
        %v296 = vsel %vm280, %v292, 0.0
        %v297 = vsel %vm281, %v293, 0.0
        %298 = vst [vmem:[#allocation3] sm:$0xf] %v296
        %299 = vst [vmem:[#allocation3 + $0x8] sm:$0xf] %v297
        %v300 = vld [vmem:[#allocation2] sm:$0xff]
        %v301 = vld [vmem:[#allocation2 + $0x8] sm:$0xf]
        %v304 = vcombine.low %v300, %v300
        %v305 = vcombine.low %v301, %v301
        %306 = vrot.lane.b32.xlu0 %v304, 16
        %v307 = vpop.permute.xlu0 %306
        %308 = vrot.lane.b32.xlu0 %v300, 16
        %v309 = vpop.permute.xlu0 %308
        %310 = vrot.lane.b32.xlu0 %v305, 16
        %v311 = vpop.permute.xlu0 %310
        %vm312 = vcmask 130048
        %v313 = vsel %vm312, %v307, %v309
        %v314 = vsel %vm312, %v309, %v311
        %317 = vst [vmem:[#allocation3] sm:$0xf0] %v313
        %318 = vst [vmem:[#allocation3 + $0x8] sm:$0xf0] %v314
        %v319 = vld [vmem:[#allocation2] sm:$0xff]
        %v320 = vld [vmem:[#allocation2 + $0x8] sm:$0xf]
        %v321 = vsel %vm273, 1, 0
        %v322 = vsel %vm274, 1, 0
        %vm323 = vcmp.eq.s32.totalorder %v321, 1
        %vm324 = vcmp.eq.s32.totalorder %v322, 1
        %v327 = vcombine.high %v319, %v319
        %328 = vrot.lane.b32.xlu0 %v319, 15
        %v329 = vpop.permute.xlu0 %328
        %330 = vrot.lane.b32.xlu0 %v327, 15
        %v331 = vpop.permute.xlu0 %330
        %332 = vrot.lane.b32.xlu0 %v320, 15
        %v333 = vpop.permute.xlu0 %332
        %vm334 = vcmask 121856
        %v335 = vsel %vm334, %v329, %v331
        %v336 = vsel %vm334, %v331, %v333
        %v339 = vsel %vm323, %v335, 0.0
        %v340 = vsel %vm324, %v336, 0.0
        %341 = vst [vmem:[#allocation3 + $0x10] sm:$0xf] %v339
        %342 = vst [vmem:[#allocation3 + $0x18] sm:$0xf] %v340
        %v343 = vld [vmem:[#allocation2] sm:$0xff]
        %v344 = vld [vmem:[#allocation2 + $0x8] sm:$0xf]
        %v347 = vcombine.high %v343, %v343
        %348 = vrot.lane.b32.xlu0 %v343, 1
        %v349 = vpop.permute.xlu0 %348
        %350 = vrot.lane.b32.xlu0 %v347, 1
        %v351 = vpop.permute.xlu0 %350
        %352 = vrot.lane.b32.xlu0 %v344, 1
        %v353 = vpop.permute.xlu0 %352
        %vm354 = vcmask 7168
        %v355 = vsel %vm354, %v349, %v351
        %v356 = vsel %vm354, %v351, %v353
        %v359 = vsel %vm280, %v355, 0.0
        %v360 = vsel %vm281, %v356, 0.0
        %v363 = vrot.slane %v359, 4
        %v364 = vrot.slane %v360, 4
        %367 = vst [vmem:[#allocation3 + $0x10] sm:$0xf0] %v363
        %368 = vst [vmem:[#allocation3 + $0x18] sm:$0xf0] %v364
        %v369 = vld [vmem:[#allocation2 + $0x4] sm:$0xff]
        %v371 = vcombine.high %v369, %v369
        %373 = vst [vmem:[#allocation3 + $0x20] sm:$0xf] %v369
        %374 = vst [vmem:[#allocation3 + $0x28] sm:$0xf] %v371
        %v375 = vld [vmem:[#allocation2 + $0x4] sm:$0xff]
        %v376 = vld [vmem:[#allocation2 + $0xc] sm:$0xf]
        %v379 = vcombine.high %v375, %v375
        %380 = vrot.lane.b32.xlu0 %v375, 127
        %v381 = vpop.permute.xlu0 %380
        %382 = vrot.lane.b32.xlu0 %v379, 127
        %v383 = vpop.permute.xlu0 %382
        %384 = vrot.lane.b32.xlu0 %v376, 127
        %v385 = vpop.permute.xlu0 %384
        %vm386 = vcmask 1039360
        %v387 = vsel %vm386, %v381, %v383
        %v388 = vsel %vm386, %v383, %v385
        %v391 = vsel %vm323, %v387, 0.0
        %v392 = vsel %vm324, %v388, 0.0
        %v395 = vrot.slane %v391, 4
        %v396 = vrot.slane %v392, 4
        %399 = vst [vmem:[#allocation3 + $0x20] sm:$0xf0] %v395
        %400 = vst [vmem:[#allocation3 + $0x28] sm:$0xf0] %v396
        %v401 = vld [vmem:[#allocation2 + $0x4] sm:$0xff]
        %v402 = vld [vmem:[#allocation2 + $0xc] sm:$0xf]
        %v405 = vcombine.high %v401, %v401
        %406 = vrot.lane.b32.xlu0 %v401, 113
        %v407 = vpop.permute.xlu0 %406
        %408 = vrot.lane.b32.xlu0 %v405, 113
        %v409 = vpop.permute.xlu0 %408
        %410 = vrot.lane.b32.xlu0 %v402, 113
        %v411 = vpop.permute.xlu0 %410
        %vm412 = vcmask 924672
        %v413 = vsel %vm412, %v407, %v409
        %v414 = vsel %vm412, %v409, %v411
        %v417 = vsel %vm280, %v413, 0.0
        %v418 = vsel %vm281, %v414, 0.0
        %419 = vst [vmem:[#allocation3 + $0x30] sm:$0xf] %v417
        %420 = vst [vmem:[#allocation3 + $0x38] sm:$0xf] %v418
        %v421 = vld [vmem:[#allocation2 + $0x4] sm:$0xff]
        %v422 = vld [vmem:[#allocation2 + $0xc] sm:$0xf]
        %v425 = vcombine.low %v421, %v421
        %v426 = vcombine.low %v422, %v422
        %427 = vrot.lane.b32.xlu0 %v425, 112
        %v428 = vpop.permute.xlu0 %427
        %429 = vrot.lane.b32.xlu0 %v421, 112
        %v430 = vpop.permute.xlu0 %429
        %431 = vrot.lane.b32.xlu0 %v426, 112
        %v432 = vpop.permute.xlu0 %431
        %vm433 = vcmask 916480
        %v434 = vsel %vm433, %v428, %v430
        %v435 = vsel %vm433, %v430, %v432
        %438 = vst [vmem:[#allocation3 + $0x30] sm:$0xf0] %v434
        %439 = vst [vmem:[#allocation3 + $0x38] sm:$0xf0] %v435
        %v440 = vld [vmem:[#allocation2 + $0x4] sm:$0xff]
        %v441 = vld [vmem:[#allocation2 + $0xc] sm:$0xf]
        %v444 = vcombine.high %v440, %v440
        %445 = vrot.lane.b32.xlu0 %v440, 111
        %v446 = vpop.permute.xlu0 %445
        %447 = vrot.lane.b32.xlu0 %v444, 111
        %v448 = vpop.permute.xlu0 %447
        %449 = vrot.lane.b32.xlu0 %v441, 111
        %v450 = vpop.permute.xlu0 %449
        %vm451 = vcmask 908288
        %v452 = vsel %vm451, %v446, %v448
        %v453 = vsel %vm451, %v448, %v450
        %v456 = vsel %vm323, %v452, 0.0
        %v457 = vsel %vm324, %v453, 0.0
        %458 = vst [vmem:[#allocation3 + $0x40] sm:$0xf] %v456
        %459 = vst [vmem:[#allocation3 + $0x48] sm:$0xf] %v457
        %v460 = vld [vmem:[%s1] sm:$0xf]
        %v461 = vld [vmem:[#allocation3] sm:$0xff]
        %v462 = vld [vmem:[#allocation3 + $0x8] sm:$0xff]
        %v463 = vld [vmem:[#allocation3 + $0x10] sm:$0xff]
        %v464 = vld [vmem:[#allocation3 + $0x18] sm:$0xff]
        %v465 = vld [vmem:[#allocation3 + $0x20] sm:$0xff]
        %v466 = vld [vmem:[#allocation3 + $0x28] sm:$0xff]
        %v467 = vld [vmem:[#allocation3 + $0x30] sm:$0xff]
        %v468 = vld [vmem:[#allocation3 + $0x38] sm:$0xff]
        %v469 = vld [vmem:[#allocation3 + $0x40] sm:$0xf]
        %v470 = vld [vmem:[#allocation3 + $0x48] sm:$0xf]
        %v471 = vld [vmem:[%s2] sm:$0xf]
        %473 = vset.pattern.permute.xlu0 0
        %474 = vperm.xlu0 %473, %v471
        %v475 = vpop.permute.xlu0 %474
        %vm477 = vcmask 293888
        %v479 = vsel %vm477, %v460, 0
        %vm481 = vcmask 1043456
        %v483 = vsel %vm481, %v469, 0
        %v486 = vsel %vm481, %v470, 0
        %488 = vmatprep.subr.mxu0 %v462
        %489 = vmatpush1.msra.mxu0 %v461
        %490 = vmatprep.subr.mxu0 %v464
        %491 = vmatpush1.msra.mxu0 %v463
        %492 = vmatprep.subr.mxu0 %v466
        %493 = vmatpush1.msra.mxu0 %v465
        %494 = vmatprep.subr.mxu0 %v468
        %495 = vmatpush1.msra.mxu0 %v467
        %496 = vmatprep.subr.mxu0 %v486
        %497 = vmatpush1.msra.mxu0 %v483
        %498 = vmatprep.subr.mxu0 0.0
        %499 = vmatpush1.msra.mxu0 0.0
        %500 = vmatprep.subr.mxu0 0.0
        %501 = vmatpush1.msra.mxu0 0.0
        %502 = vmatprep.subr.mxu0 0.0
        %503 = vmatpush1.msra.mxu0 0.0
        %504 = vmatprep.subr.mxu0 0.0
        %505 = vmatpush1.msra.mxu0 0.0
        %506 = vmatprep.subr.mxu0 0.0
        %507 = vmatpush1.msra.mxu0 0.0
        %508 = vmatprep.subr.mxu0 0.0
        %509 = vmatpush1.msra.mxu0 0.0
        %510 = vmatprep.subr.mxu0 0.0
        %511 = vmatpush1.msra.mxu0 0.0
        %512 = vmatprep.subr.mxu0 0.0
        %513 = vmatpush1.msra.mxu0 0.0
        %514 = vmatprep.subr.mxu0 0.0
        %515 = vmatpush1.msra.mxu0 0.0
        %516 = vmatprep.subr.mxu0 0.0
        %517 = vmatpush1.msra.mxu0 0.0
        %518 = vmatprep.subr.mxu0 0.0
        %519 = vmatpush1.msra.mxu0 0.0
        %520 = vmatprep.subr.mxu0 0.0
        %521 = vmatpush1.msra.mxu0 0.0
        %522 = vmatprep.subr.mxu0 0.0
        %523 = vmatpush1.msra.mxu0 0.0
        %524 = vmatprep.subr.mxu0 0.0
        %525 = vmatpush1.msra.mxu0 0.0
        %526 = vmatprep.subr.mxu0 0.0
        %527 = vmatpush1.msra.mxu0 0.0
        %528 = vmatprep.subr.mxu0 0.0
        %529 = vmatpush1.msra.mxu0 0.0
        %530 = vmatprep.subr.mxu0 0.0
        %531 = vmatpush1.msra.mxu0 0.0
        %532 = vmatprep.subr.mxu0 0.0
        %533 = vmatpush1.msra.mxu0 0.0
        %534 = vmatprep.subr.mxu0 0.0
        %535 = vmatpush1.msra.mxu0 0.0
        %536 = vmatprep.subr.mxu0 0.0
        %537 = vmatpush1.msra.mxu0 0.0
        %538 = vmatprep.subr.mxu0 0.0
        %539 = vmatpush1.msra.mxu0 0.0
        %540 = vmatprep.subr.mxu0 0.0
        %541 = vmatpush1.msra.mxu0 0.0
        %542 = vmatprep.subr.mxu0 0.0
        %543 = vmatpush1.msra.mxu0 0.0
        %544 = vmatprep.subr.mxu0 0.0
        %545 = vmatpush1.msra.mxu0 0.0
        %546 = vmatprep.subr.mxu0 0.0
        %547 = vmatpush1.msra.mxu0 0.0
        %548 = vmatprep.subr.mxu0 0.0
        %549 = vmatpush1.msra.mxu0 0.0
        %550 = vmatprep.subr.mxu0 0.0
        %551 = vmatpush1.msra.mxu0 0.0
        %552 = vmatprep.mubr.f32.mxu0 0.0
        %553 = vmatmul.mubr.f32.gmra.mrb[0].mxu0 %v479
        %v554 = vpop.f32.mrb[0].mxu0
        %v555 = vadd.f32 %v475, %v554
        %v556 = vpop.f32.mrb[0].mxu0
        %v557 = vadd.f32 %v475, %v556
        %558 = vdwg.mxu0
        %v559 = vmax.f32 %v555, 0.0
        %v560 = vmax.f32 %v557, 0.0
        %v563 = vcombine.low %v559, %v560
        %565 = vst [vmem:[#allocation2 + $0x4] sm:$0xff] %v563
        %v566 = vld [vmem:[#allocation2] sm:$0xff]
        %v567 = vld [vmem:[#allocation2 + $0x8] sm:$0xf]
        %v570 = vcombine.high %v566, %v566
        %571 = vrot.lane.b32.xlu0 %v566, 17
        %v572 = vpop.permute.xlu0 %571
        %573 = vrot.lane.b32.xlu0 %v570, 17
        %v574 = vpop.permute.xlu0 %573
        %575 = vrot.lane.b32.xlu0 %v567, 17
        %v576 = vpop.permute.xlu0 %575
        %v577 = vsel %vm291, %v572, %v574
        %v578 = vsel %vm291, %v574, %v576
        %v581 = vsel %vm280, %v577, 0.0
        %v582 = vsel %vm281, %v578, 0.0
        %583 = vst [vmem:[#allocation3] sm:$0xf] %v581
        %584 = vst [vmem:[#allocation3 + $0x8] sm:$0xf] %v582
        %v585 = vld [vmem:[#allocation2] sm:$0xff]
        %v586 = vld [vmem:[#allocation2 + $0x8] sm:$0xf]
        %v589 = vcombine.low %v585, %v585
        %v590 = vcombine.low %v586, %v586
        %591 = vrot.lane.b32.xlu0 %v589, 16
        %v592 = vpop.permute.xlu0 %591
        %593 = vrot.lane.b32.xlu0 %v585, 16
        %v594 = vpop.permute.xlu0 %593
        %595 = vrot.lane.b32.xlu0 %v590, 16
        %v596 = vpop.permute.xlu0 %595
        %v597 = vsel %vm312, %v592, %v594
        %v598 = vsel %vm312, %v594, %v596
        %601 = vst [vmem:[#allocation3] sm:$0xf0] %v597
        %602 = vst [vmem:[#allocation3 + $0x8] sm:$0xf0] %v598
        %v603 = vld [vmem:[#allocation2] sm:$0xff]
        %v604 = vld [vmem:[#allocation2 + $0x8] sm:$0xf]
        %v607 = vcombine.high %v603, %v603
        %608 = vrot.lane.b32.xlu0 %v603, 15
        %v609 = vpop.permute.xlu0 %608
        %610 = vrot.lane.b32.xlu0 %v607, 15
        %v611 = vpop.permute.xlu0 %610
        %612 = vrot.lane.b32.xlu0 %v604, 15
        %v613 = vpop.permute.xlu0 %612
        %v614 = vsel %vm334, %v609, %v611
        %v615 = vsel %vm334, %v611, %v613
        %v618 = vsel %vm323, %v614, 0.0
        %v619 = vsel %vm324, %v615, 0.0
        %620 = vst [vmem:[#allocation3 + $0x10] sm:$0xf] %v618
        %621 = vst [vmem:[#allocation3 + $0x18] sm:$0xf] %v619
        %v622 = vld [vmem:[#allocation2] sm:$0xff]
        %v623 = vld [vmem:[#allocation2 + $0x8] sm:$0xf]
        %v626 = vcombine.high %v622, %v622
        %627 = vrot.lane.b32.xlu0 %v622, 1
        %v628 = vpop.permute.xlu0 %627
        %629 = vrot.lane.b32.xlu0 %v626, 1
        %v630 = vpop.permute.xlu0 %629
        %631 = vrot.lane.b32.xlu0 %v623, 1
        %v632 = vpop.permute.xlu0 %631
        %v633 = vsel %vm354, %v628, %v630
        %v634 = vsel %vm354, %v630, %v632
        %v637 = vsel %vm280, %v633, 0.0
        %v638 = vsel %vm281, %v634, 0.0
        %v641 = vrot.slane %v637, 4
        %v642 = vrot.slane %v638, 4
        %645 = vst [vmem:[#allocation3 + $0x10] sm:$0xf0] %v641
        %646 = vst [vmem:[#allocation3 + $0x18] sm:$0xf0] %v642
        %v647 = vld [vmem:[#allocation2 + $0x4] sm:$0xff]
        %v649 = vcombine.high %v647, %v647
        %651 = vst [vmem:[#allocation3 + $0x20] sm:$0xf] %v647
        %652 = vst [vmem:[#allocation3 + $0x28] sm:$0xf] %v649
        %v653 = vld [vmem:[#allocation2 + $0x4] sm:$0xff]
        %v654 = vld [vmem:[#allocation2 + $0xc] sm:$0xf]
        %v657 = vcombine.high %v653, %v653
        %658 = vrot.lane.b32.xlu0 %v653, 127
        %v659 = vpop.permute.xlu0 %658
        %660 = vrot.lane.b32.xlu0 %v657, 127
        %v661 = vpop.permute.xlu0 %660
        %662 = vrot.lane.b32.xlu0 %v654, 127
        %v663 = vpop.permute.xlu0 %662
        %v664 = vsel %vm386, %v659, %v661
        %v665 = vsel %vm386, %v661, %v663
        %v668 = vsel %vm323, %v664, 0.0
        %v669 = vsel %vm324, %v665, 0.0
        %v672 = vrot.slane %v668, 4
        %v673 = vrot.slane %v669, 4
        %676 = vst [vmem:[#allocation3 + $0x20] sm:$0xf0] %v672
        %677 = vst [vmem:[#allocation3 + $0x28] sm:$0xf0] %v673
        %v678 = vld [vmem:[#allocation2 + $0x4] sm:$0xff]
        %v679 = vld [vmem:[#allocation2 + $0xc] sm:$0xf]
        %v682 = vcombine.high %v678, %v678
        %683 = vrot.lane.b32.xlu0 %v678, 113
        %v684 = vpop.permute.xlu0 %683
        %685 = vrot.lane.b32.xlu0 %v682, 113
        %v686 = vpop.permute.xlu0 %685
        %687 = vrot.lane.b32.xlu0 %v679, 113
        %v688 = vpop.permute.xlu0 %687
        %v689 = vsel %vm412, %v684, %v686
        %v690 = vsel %vm412, %v686, %v688
        %v693 = vsel %vm280, %v689, 0.0
        %v694 = vsel %vm281, %v690, 0.0
        %695 = vst [vmem:[#allocation3 + $0x30] sm:$0xf] %v693
        %696 = vst [vmem:[#allocation3 + $0x38] sm:$0xf] %v694
        %v697 = vld [vmem:[#allocation2 + $0x4] sm:$0xff]
        %v698 = vld [vmem:[#allocation2 + $0xc] sm:$0xf]
        %v701 = vcombine.low %v697, %v697
        %v702 = vcombine.low %v698, %v698
        %703 = vrot.lane.b32.xlu0 %v701, 112
        %v704 = vpop.permute.xlu0 %703
        %705 = vrot.lane.b32.xlu0 %v697, 112
        %v706 = vpop.permute.xlu0 %705
        %707 = vrot.lane.b32.xlu0 %v702, 112
        %v708 = vpop.permute.xlu0 %707
        %v709 = vsel %vm433, %v704, %v706
        %v710 = vsel %vm433, %v706, %v708
        %713 = vst [vmem:[#allocation3 + $0x30] sm:$0xf0] %v709
        %714 = vst [vmem:[#allocation3 + $0x38] sm:$0xf0] %v710
        %v715 = vld [vmem:[#allocation2 + $0x4] sm:$0xff]
        %v716 = vld [vmem:[#allocation2 + $0xc] sm:$0xf]
        %v719 = vcombine.high %v715, %v715
        %720 = vrot.lane.b32.xlu0 %v715, 111
        %v721 = vpop.permute.xlu0 %720
        %722 = vrot.lane.b32.xlu0 %v719, 111
        %v723 = vpop.permute.xlu0 %722
        %724 = vrot.lane.b32.xlu0 %v716, 111
        %v725 = vpop.permute.xlu0 %724
        %v726 = vsel %vm451, %v721, %v723
        %v727 = vsel %vm451, %v723, %v725
        %v730 = vsel %vm323, %v726, 0.0
        %v731 = vsel %vm324, %v727, 0.0
        %732 = vst [vmem:[#allocation3 + $0x40] sm:$0xf] %v730
        %733 = vst [vmem:[#allocation3 + $0x48] sm:$0xf] %v731
        %v734 = vld [vmem:[%s3] sm:$0xf]
        %v735 = vld [vmem:[#allocation3] sm:$0xff]
        %v736 = vld [vmem:[#allocation3 + $0x8] sm:$0xff]
        %v737 = vld [vmem:[#allocation3 + $0x10] sm:$0xff]
        %v738 = vld [vmem:[#allocation3 + $0x18] sm:$0xff]
        %v739 = vld [vmem:[#allocation3 + $0x20] sm:$0xff]
        %v740 = vld [vmem:[#allocation3 + $0x28] sm:$0xff]
        %v741 = vld [vmem:[#allocation3 + $0x30] sm:$0xff]
        %v742 = vld [vmem:[#allocation3 + $0x38] sm:$0xff]
        %v743 = vld [vmem:[#allocation3 + $0x40] sm:$0xf]
        %v744 = vld [vmem:[#allocation3 + $0x48] sm:$0xf]
        %v745 = vld [vmem:[%s4] sm:$0xf]
        %747 = vset.pattern.permute.xlu0 0
        %748 = vperm.xlu0 %747, %v745
        %v749 = vpop.permute.xlu0 %748
        %v752 = vsel %vm477, %v734, 0
        %v755 = vsel %vm481, %v743, 0
        %v758 = vsel %vm481, %v744, 0
        %760 = vmatprep.subr.mxu0 %v736
        %761 = vmatpush1.msra.mxu0 %v735
        %762 = vmatprep.subr.mxu0 %v738
        %763 = vmatpush1.msra.mxu0 %v737
        %764 = vmatprep.subr.mxu0 %v740
        %765 = vmatpush1.msra.mxu0 %v739
        %766 = vmatprep.subr.mxu0 %v742
        %767 = vmatpush1.msra.mxu0 %v741
        %768 = vmatprep.subr.mxu0 %v758
        %769 = vmatpush1.msra.mxu0 %v755
        %770 = vmatprep.subr.mxu0 0.0
        %771 = vmatpush1.msra.mxu0 0.0
        %772 = vmatprep.subr.mxu0 0.0
        %773 = vmatpush1.msra.mxu0 0.0
        %774 = vmatprep.subr.mxu0 0.0
        %775 = vmatpush1.msra.mxu0 0.0
        %776 = vmatprep.subr.mxu0 0.0
        %777 = vmatpush1.msra.mxu0 0.0
        %778 = vmatprep.subr.mxu0 0.0
        %779 = vmatpush1.msra.mxu0 0.0
        %780 = vmatprep.subr.mxu0 0.0
        %781 = vmatpush1.msra.mxu0 0.0
        %782 = vmatprep.subr.mxu0 0.0
        %783 = vmatpush1.msra.mxu0 0.0
        %784 = vmatprep.subr.mxu0 0.0
        %785 = vmatpush1.msra.mxu0 0.0
        %786 = vmatprep.subr.mxu0 0.0
        %787 = vmatpush1.msra.mxu0 0.0
        %788 = vmatprep.subr.mxu0 0.0
        %789 = vmatpush1.msra.mxu0 0.0
        %790 = vmatprep.subr.mxu0 0.0
        %791 = vmatpush1.msra.mxu0 0.0
        %792 = vmatprep.subr.mxu0 0.0
        %793 = vmatpush1.msra.mxu0 0.0
        %794 = vmatprep.subr.mxu0 0.0
        %795 = vmatpush1.msra.mxu0 0.0
        %796 = vmatprep.subr.mxu0 0.0
        %797 = vmatpush1.msra.mxu0 0.0
        %798 = vmatprep.subr.mxu0 0.0
        %799 = vmatpush1.msra.mxu0 0.0
        %800 = vmatprep.subr.mxu0 0.0
        %801 = vmatpush1.msra.mxu0 0.0
        %802 = vmatprep.subr.mxu0 0.0
        %803 = vmatpush1.msra.mxu0 0.0
        %804 = vmatprep.subr.mxu0 0.0
        %805 = vmatpush1.msra.mxu0 0.0
        %806 = vmatprep.subr.mxu0 0.0
        %807 = vmatpush1.msra.mxu0 0.0
        %808 = vmatprep.subr.mxu0 0.0
        %809 = vmatpush1.msra.mxu0 0.0
        %810 = vmatprep.subr.mxu0 0.0
        %811 = vmatpush1.msra.mxu0 0.0
        %812 = vmatprep.subr.mxu0 0.0
        %813 = vmatpush1.msra.mxu0 0.0
        %814 = vmatprep.subr.mxu0 0.0
        %815 = vmatpush1.msra.mxu0 0.0
        %816 = vmatprep.subr.mxu0 0.0
        %817 = vmatpush1.msra.mxu0 0.0
        %818 = vmatprep.subr.mxu0 0.0
        %819 = vmatpush1.msra.mxu0 0.0
        %820 = vmatprep.subr.mxu0 0.0
        %821 = vmatpush1.msra.mxu0 0.0
        %822 = vmatprep.subr.mxu0 0.0
        %823 = vmatpush1.msra.mxu0 0.0
        %824 = vmatprep.mubr.f32.mxu0 0.0
        %825 = vmatmul.mubr.f32.gmra.mrb[0].mxu0 %v752
        %v826 = vpop.f32.mrb[0].mxu0
        %v827 = vadd.f32 %v749, %v826
        %v828 = vpop.f32.mrb[0].mxu0
        %v829 = vadd.f32 %v749, %v828
        %830 = vdwg.mxu0
        %v832 = vcombine.high %v243, %v243
        %v834 = vadd.f32 %v827, %v243
        %v835 = vadd.f32 %v829, %v832
        %v838 = vcombine.low %v834, %v835
        %840 = vst [vmem:[%s240] sm:$0xff] %v838
        %s841 = sand.u32 %s140, 1
        %s842 = scalar_lea.sflag [#allocation6], %s841
        %s843 = sand.u32 %s140, 1
        %s844 = smul.addr %s843, 8
        %s845 = scalar_lea.vmem [#allocation7], %s844
        // Predicated region
        $region45: #{tpu_custom_call.1} parent=39 // pred_check
          %p846 = pneg %p150
        $region46: #{tpu_custom_call.1} parent=39 // pred_check_branch
          %848 = sbr.rel (%p846) target = $region48
        $region47: #{tpu_custom_call.1} parent=39 // pred_region
          %s850 = ssub.s32 128, 128
          %851 = vsyncadd %s842, %s850
          %s852 = smul.addr %s22, 2
          %s853 = smul.addr %s852, 64
          %s854 = scalar_lea.hbm %s5, %s853
          %s856 = sshll.u32 %s845, 4
          %s857 = int_to_ptr.vmem [resolvable:$true] %s856
          %859 = dma.vmem_to_hbm [thread:$0]  %s857, 128, %s854, %s842
        $region48: #{tpu_custom_call.1} parent=39 // pred_fallthru
          _
      $region40: #{tpu_custom_call.1} parent=5 // pred_fallthru
        _
      %p860 = scmp.le.s32.totalorder 2, %s17
      // Predicated region
      $region49: #{tpu_custom_call.1} parent=5 // pred_check
        %p861 = pneg %p860
      $region50: #{tpu_custom_call.1} parent=5 // pred_check_branch
        %863 = sbr.rel (%p861) target = $region52
      $region51: #{tpu_custom_call.1} parent=5 // pred_region
        %s864 = ssub.s32 %s17, 2
        // Predicated region
        $region53: #{tpu_custom_call.1} parent=51 // pred_check
          %p865 = pneg %p156
        $region54: #{tpu_custom_call.1} parent=51 // pred_check_branch
          %867 = sbr.rel (%p865) target = $region56
        $region55: #{tpu_custom_call.1} parent=51 // pred_region
          %s868 = sand.u32 %s141, 1
          %s869 = scalar_lea.sflag [#allocation6], %s868
          %s870 = sand.u32 %s141, 1
          %s871 = smul.addr %s870, 8
          %s872 = scalar_lea.vmem [#allocation7], %s871
          %873 = dma.done %s869, 128
        $region56: #{tpu_custom_call.1} parent=51 // pred_fallthru
          _
      $region52: #{tpu_custom_call.1} parent=5 // pred_fallthru
        _
    $region6: #{tpu_custom_call.1} parent=1 // loop_footer
      %s21 = sadd.s32 1, %s17
    $region7: #{tpu_custom_call.1} parent=1 // loop_footer_branch
      %16 = sbr.rel target = $region3
    $region8: #{tpu_custom_call.1} parent=1 // loop_exit
      _
    %874 = vsyncpa [#allocation5], 1
    %s875 = scalar_lea.sflag [#allocation5], 1
    %876 = vsyncpa %s875, 1
    %877 = vsyncpa [#allocation6], 1
    %s878 = scalar_lea.sflag [#allocation6], 1
    %879 = vsyncpa %s878, 1

</llo_original>
